<compile_context>
chip_gen: v5e
topology: v5e:2x2
jax: 0.10.0
libtpu: 0.0.40
codegen_flags: <defaults>
</compile_context>

<pallas_src>
import functools

import numpy as np
import jax
import jax.numpy as jnp
from jax.experimental import pallas as pl
from jax.experimental.pallas import tpu as pltpu


def _focal_loss_kernel(x_ref, t_ref, o_ref, *, gamma, alpha_vals, chunk):
    si = pl.program_id(2)

    @pl.when(si == 0)
    def _():
        o_ref[...] = jnp.zeros_like(o_ref)

    c, tile_s = x_ref.shape
    n_chunks = tile_s // chunk            # static Python int

    def chunk_body(off):
        x = x_ref[:, pl.ds(off, chunk)].astype(jnp.float32)   # (C, chunk)
        t = t_ref[:, pl.ds(off, chunk)]                        # (1, chunk) int32

        # log-softmax over the class (sublane) axis.
        m = jnp.max(x, axis=0, keepdims=True)                  # (1, chunk)
        z = x - m                                              # (C, chunk)
        ez = jnp.exp(z)                                        # (C, chunk)
        sez = jnp.sum(ez, axis=0, keepdims=True)               # (1, chunk)

        cls = jax.lax.broadcasted_iota(jnp.int32, x.shape, 0)
        is_t = cls == t                                        # (C, chunk) mask
        # gather z at the target class via masked select (no one-hot f32 mult)
        z_t = jnp.sum(jnp.where(is_t, z, 0.0), axis=0, keepdims=True)

        logpt = z_t - jnp.log(sez)                             # <= 0
        pt = jnp.exp(logpt)                                    # <= 1, EUP on a row

        if alpha_vals is not None:
            # compile-time alpha -> constant select chain on the target row
            at = jnp.full(t.shape, alpha_vals[0], jnp.float32)
            for k in range(1, min(len(alpha_vals), c)):
                at = jnp.where(t == k, jnp.float32(alpha_vals[k]), at)
            logpt = logpt * at

        g = float(gamma)
        if g == 0.0:
            loss = -logpt
        else:
            omp = jnp.maximum(1.0 - pt, 0.0)   # pow-safe for fractional gamma
            if g == int(g) and 1.0 <= g <= 8.0:
                mod = omp
                for _ in range(int(g) - 1):
                    mod = mod * omp
            else:
                mod = omp ** g
            loss = -(mod * logpt)

        # Padded lanes (target == -1) contribute exactly zero.
        loss = jnp.where(t >= 0, loss, 0.0)
        o_ref[:, pl.ds(off, chunk)] += loss    # lane-dense per-lane partial sums

    if n_chunks <= 8:
        for i in range(n_chunks):              # static offsets, fully unrolled
            chunk_body(i * chunk)
    else:
        @pl.loop(0, n_chunks)
        def _(i):
            chunk_body(pl.multiple_of(i * chunk, chunk))


def _round_up(x, m):
    return ((x + m - 1) // m) * m


def focal_loss(logits, target, gamma=0.0, alpha=None, size_average=True,
               tile_s=None):
    # ---- reshape to (N, C, S) WITHOUT transposing (classes stay on sublanes) ----
    if logits.ndim > 2:
        n, c = logits.shape[0], logits.shape[1]
        x = logits.reshape(n, c, -1)                     # free reshape of NCHW
        t = target.reshape(n, 1, -1).astype(jnp.int32)   # (N, 1, H*W)
    else:
        # TODO(synk): the 2-D (M, C) path still pays one extra HBM pass for this
        # transpose; a sublane-M / lane-C kernel variant would remove it.
        _, c = logits.shape
        n = 1
        x = jnp.transpose(logits)[None]                  # (1, C, M)
        t = target.reshape(1, 1, -1).astype(jnp.int32)
    s = x.shape[-1]
    m_rows = n * s                                       # rows in PyTorch terms

    # ---- alpha handling mirrors __init__: float -> [a, 1-a]; list -> weights ----
    if alpha is None:
        alpha_vals = None
    elif isinstance(alpha, (float, int)) and not isinstance(alpha, bool):
        alpha_vals = (float(alpha), 1.0 - float(alpha))
    else:
        # list / tuple / np.ndarray / concrete jax Array of per-class weights.
        # TODO(synk): traced (jit-abstract) alpha arrays are not supported here.
        alpha_vals = tuple(float(v) for v in np.asarray(alpha).reshape(-1))
    if alpha_vals is not None and len(alpha_vals) < c:
        # PyTorch's alpha.gather(0, target) would error; do not silently zero.
        raise ValueError(
            f"alpha has {len(alpha_vals)} entries but there are {c} classes")

    # ---- tiling --------------------------------------------------------------
    itemsize = jnp.dtype(x.dtype).itemsize
    s_128 = _round_up(s, 128)

    # Inner compute chunk (lanes): keep the per-chunk (C, chunk) f32 slabs small
    # enough to live in vregs (no multi-MiB VMEM temporaries).
    chunk = max(128, min(2048, (8192 // c) // 128 * 128))
    chunk = min(chunk, s_128)

    # Per-grid-step lane tile from an ~8 MiB logits DMA budget; the cap is the
    # 2 MiB output row (1 << 19 lanes), not the old fixed 1 << 16 lane cap.
    if tile_s is None:
        budget = 8 * 1024 * 1024
        tile_s = budget // (c * itemsize)
    tile_s = int(min(int(tile_s), 1 << 19, _round_up(s, chunk)))
    tile_s = max(chunk, (tile_s // chunk) * chunk)

    num_tiles = -(-s // tile_s)                       # ceil
    if n == 1 and num_tiles > 1 and num_tiles % 2 == 1:
        num_tiles += 1                                # enable spatial megacore split
    # rebalance so padding waste on the last tile is minimal
    tile_s = _round_up(-(-s // num_tiles), chunk)
    s_pad = num_tiles * tile_s

    if s_pad != s:
        x = jnp.pad(x, ((0, 0), (0, 0), (0, s_pad - s)))
        t = jnp.pad(t, ((0, 0), (0, 0), (0, s_pad - s)), constant_values=-1)

    # Spatial super-tiles: second "parallel" grid axis so the v7x megacore can
    # split the spatial dimension even when N is small (no-op on v5e / v6e).
    n_outer = 2 if (num_tiles % 2 == 0 and num_tiles >= 2) else 1
    n_inner = num_tiles // n_outer
    grid = (n, n_outer, n_inner)

    in_specs = [
        pl.BlockSpec((pl.Squeezed(), c, tile_s),
                     lambda b, o, si: (b, 0, o * n_inner + si)),   # logits
        pl.BlockSpec((pl.Squeezed(), 1, tile_s),
                     lambda b, o, si: (b, 0, o * n_inner + si)),   # targets
    ]

    kernel = functools.partial(_focal_loss_kernel, gamma=float(gamma),
                               alpha_vals=alpha_vals, chunk=chunk)

    # Explicit VMEM budget: double-buffered logits/targets blocks + output rows
    # + headroom for in-kernel chunk temporaries.  Keeps the larger tiles
    # compiling on v5e (16 MiB scoped default) and inside v7x's 64 MiB VMEM.
    blk_bytes = c * tile_s * itemsize + tile_s * 4
    vmem_limit = 2 * blk_bytes + 2 * tile_s * 4 + (6 << 20)
    vmem_limit = int(min(max(vmem_limit, 16 << 20), 56 << 20))

    # TODO(synk): for very large C (hundreds of classes) an online-softmax loop
    # over sublane chunks of C would further cut the per-chunk working set.
    partials = pl.pallas_call(
        kernel,
        out_shape=jax.ShapeDtypeStruct((n, n_outer, 1, tile_s), jnp.float32),
        grid_spec=pltpu.PrefetchScalarGridSpec(
            num_scalar_prefetch=0,
            grid=grid,
            in_specs=in_specs,
            out_specs=pl.BlockSpec((pl.Squeezed(), pl.Squeezed(), 1, tile_s),
                                   lambda b, o, si: (b, o, 0, 0)),
        ),
        compiler_params=pltpu.CompilerParams(
            dimension_semantics=("parallel", "parallel", "arbitrary"),
            vmem_limit_bytes=vmem_limit),
    )(x, t)

    total = jnp.sum(partials)                     # tiny reduce in XLA
    if size_average:
        return total / jnp.float32(m_rows)
    return total


def _focal_loss_ref(logits, target, gamma=0.0, alpha=None, size_average=True):
    """Pure-JAX reference mirroring the PyTorch forward."""
    x = logits
    if x.ndim > 2:
        n, c = x.shape[0], x.shape[1]
        x = jnp.transpose(x.reshape(n, c, -1), (0, 2, 1)).reshape(-1, c)
    t = target.reshape(-1).astype(jnp.int32)
    logp = jax.nn.log_softmax(x.astype(jnp.float32), axis=1)
    logpt = jnp.take_along_axis(logp, t[:, None], axis=1)[:, 0]
    pt = jnp.exp(logpt)
    if alpha is not None:
        if isinstance(alpha, (float, int)) and not isinstance(alpha, bool):
            alpha = [float(alpha), 1.0 - float(alpha)]
        at = jnp.asarray(np.asarray(alpha), jnp.float32)[t]
        logpt = logpt * at
    loss = -1.0 * (1.0 - pt) ** float(gamma) * logpt
    return loss.mean() if size_average else loss.sum()


if __name__ == "__main__":
    key = jax.random.PRNGKey(0)
    k1, k2, k3, k4, k5, k6 = jax.random.split(key, 6)

    N, C, H, W = 2, 4, 16, 16                     # S = H*W = 256 lanes per batch row
    logits = jax.random.normal(k1, (N, C, H, W), dtype=jnp.float32)
    target = jax.random.randint(k2, (N, H, W), 0, C, dtype=jnp.int32)

    gamma = 2.0
    alpha = [0.25, 0.5, 0.75, 1.0]                # per-class weights (len == C)

    out = jax.block_until_ready(
        focal_loss(logits, target, gamma=gamma, alpha=alpha, size_average=True))
    ref = _focal_loss_ref(logits, target, gamma=gamma, alpha=alpha, size_average=True)
    assert jnp.allclose(out, ref, rtol=1e-5, atol=1e-5), (out, ref)

    # default config (gamma=0, alpha=None), sum reduction
    out0 = jax.block_until_ready(focal_loss(logits, target, size_average=False))
    ref0 = _focal_loss_ref(logits, target, size_average=False)
    assert jnp.allclose(out0, ref0, rtol=1e-5, atol=1e-5), (out0, ref0)

    # non-integer gamma (clamped pow path; pt <= 1 by construction)
    out15 = jax.block_until_ready(focal_loss(logits, target, gamma=1.5))
    ref15 = _focal_loss_ref(logits, target, gamma=1.5)
    assert jnp.allclose(out15, ref15, rtol=1e-5, atol=1e-5), (out15, ref15)

    # bf16 logits flow through the DMA in bf16 (cast to f32 inside the kernel)
    logits_bf16 = logits.astype(jnp.bfloat16)
    outb = jax.block_until_ready(focal_loss(logits_bf16, target, gamma=gamma))
    refb = _focal_loss_ref(logits_bf16, target, gamma=gamma)
    assert jnp.allclose(outb, refb, rtol=1e-3, atol=1e-3), (outb, refb)

    # ragged spatial size (H*W = 100 -> padded to 128 inside the wrapper)
    Hr = Wr = 10
    logits_r = jax.random.normal(k3, (N, C, Hr, Wr), dtype=jnp.float32)
    target_r = jax.random.randint(k4, (N, Hr, Wr), 0, C, dtype=jnp.int32)
    outr = jax.block_until_ready(focal_loss(logits_r, target_r, gamma=2.0))
    refr = _focal_loss_ref(logits_r, target_r, gamma=2.0)
    assert jnp.allclose(outr, refr, rtol=1e-5, atol=1e-5), (outr, refr)

    # scalar-float alpha -> [a, 1-a] (binary-class ctor path of the module)
    logits2 = jax.random.normal(k5, (N, 2, H, W), dtype=jnp.float32)
    target2 = jax.random.randint(k6, (N, H, W), 0, 2, dtype=jnp.int32)
    out2 = jax.block_until_ready(
        focal_loss(logits2, target2, gamma=2.0, alpha=0.25, size_average=True))
    ref2 = _focal_loss_ref(logits2, target2, gamma=2.0, alpha=0.25, size_average=True)
    assert jnp.allclose(out2, ref2, rtol=1e-5, atol=1e-5), (out2, ref2)

    print("KERNEL_OK")
</pallas_src>

<mosaic_0001>
module attributes {stable_mosaic.version = 11 : i64} {
  func.func @_focal_loss_kernel(%arg0: i32, %arg1: i32, %arg2: i32, %arg3: memref<1x4x256xf32, #tpu.memory_space<vmem>>, %arg4: memref<1x1x256xi32, #tpu.memory_space<vmem>>, %arg5: memref<1x1x1x256xf32, #tpu.memory_space<vmem>>) attributes {dimension_semantics = [#tpu.dimension_semantics<parallel>, #tpu.dimension_semantics<parallel>, #tpu.dimension_semantics<arbitrary>], iteration_bounds = array<i64: 2, 1, 1>, scalar_prefetch = 0 : i64, scratch_operands = 0 : i64, tpu.core_type = #tpu.core_type<tc>, window_params = [{transform_indices = @transform_0, window_bounds = array<i64: 1, 4, 256>}, {transform_indices = @transform_1, window_bounds = array<i64: 1, 1, 256>}, {transform_indices = @transform_2, window_bounds = array<i64: 1, 1, 1, 256>}]} {
    %c0_i32 = arith.constant 0 : i32
    %0 = arith.cmpi eq, %arg2, %c0_i32 : i32
    %1 = arith.extui %0 : i1 to i32
    %c0_i32_0 = arith.constant 0 : i32
    %2 = arith.cmpi ne, %1, %c0_i32_0 : i32
    scf.if %2 {
      %cst_26 = arith.constant 0.000000e+00 : f32
      %56 = vector.broadcast %cst_26 : f32 to vector<1x256xf32>
      %c0_27 = arith.constant 0 : index
      %c0_28 = arith.constant 0 : index
      %c0_29 = arith.constant 0 : index
      %c0_30 = arith.constant 0 : index
      %57 = vector.load %arg5[%c0_27, %c0_28, %c0_29, %c0_30] : memref<1x1x1x256xf32, #tpu.memory_space<vmem>>, vector<1x1x1x256xf32>
      %58 = vector.shape_cast %57 : vector<1x1x1x256xf32> to vector<1x256xf32>
      %59 = vector.shape_cast %56 : vector<1x256xf32> to vector<1x1x1x256xf32>
      tpu.vector_store %arg5[%c0_27, %c0_28, %c0_29, %c0_30], %59 {strides = array<i32>} : memref<1x1x1x256xf32, #tpu.memory_space<vmem>>, vector<1x1x1x256xf32>,
    } else {
    }
    %c0 = arith.constant 0 : index
    %c0_1 = arith.constant 0 : index
    %c0_2 = arith.constant 0 : index
    %3 = vector.load %arg3[%c0, %c0_1, %c0_2] : memref<1x4x256xf32, #tpu.memory_space<vmem>>, vector<1x4x256xf32>
    %4 = vector.shape_cast %3 : vector<1x4x256xf32> to vector<4x256xf32>
    %c0_3 = arith.constant 0 : index
    %c0_4 = arith.constant 0 : index
    %c0_5 = arith.constant 0 : index
    %5 = vector.load %arg4[%c0_3, %c0_4, %c0_5] : memref<1x1x256xi32, #tpu.memory_space<vmem>>, vector<1x1x256xi32>
    %6 = vector.shape_cast %5 : vector<1x1x256xi32> to vector<1x256xi32>
    %cst = arith.constant dense<0xFF800000> : vector<256xf32>
    %7 = vector.multi_reduction <maximumf>, %4, %cst [0] : vector<4x256xf32> to vector<256xf32>
    %8 = vector.shape_cast %7 : vector<256xf32> to vector<1x256xf32>
    %9 = vector.broadcast %8 : vector<1x256xf32> to vector<4x256xf32>
    %10 = arith.subf %4, %9 : vector<4x256xf32>
    %11 = math.exp %10 : vector<4x256xf32>
    %cst_6 = arith.constant dense<0.000000e+00> : vector<256xf32>
    %12 = vector.multi_reduction <add>, %11, %cst_6 [0] : vector<4x256xf32> to vector<256xf32>
    %13 = vector.shape_cast %12 : vector<256xf32> to vector<1x256xf32>
    %14 = tpu.iota {dimensions = array<i32: 0>} : vector<4x256xi32>
    %15 = vector.broadcast %6 : vector<1x256xi32> to vector<4x256xi32>
    %16 = arith.cmpi eq, %14, %15 : vector<4x256xi32>
    %cst_7 = arith.constant 0.000000e+00 : f32
    %17 = vector.broadcast %cst_7 : f32 to vector<4x256xf32>
    %18 = arith.select %16, %10, %17 : vector<4x256xi1>, vector<4x256xf32>
    %cst_8 = arith.constant dense<0.000000e+00> : vector<256xf32>
    %19 = vector.multi_reduction <add>, %18, %cst_8 [0] : vector<4x256xf32> to vector<256xf32>
    %20 = vector.shape_cast %19 : vector<256xf32> to vector<1x256xf32>
    %21 = math.log %13 : vector<1x256xf32>
    %22 = arith.subf %20, %21 : vector<1x256xf32>
    %23 = math.exp %22 : vector<1x256xf32>
    %cst_9 = arith.constant 2.500000e-01 : f32
    %24 = vector.broadcast %cst_9 : f32 to vector<1x256xf32>
    %c1_i32 = arith.constant 1 : i32
    %25 = vector.broadcast %c1_i32 : i32 to vector<1x256xi32>
    %26 = arith.cmpi eq, %6, %25 : vector<1x256xi32>
    %cst_10 = arith.constant 5.000000e-01 : f32
    %27 = vector.broadcast %cst_10 : f32 to vector<1x256xf32>
    %28 = arith.select %26, %27, %24 : vector<1x256xi1>, vector<1x256xf32>
    %c2_i32 = arith.constant 2 : i32
    %29 = vector.broadcast %c2_i32 : i32 to vector<1x256xi32>
    %30 = arith.cmpi eq, %6, %29 : vector<1x256xi32>
    %cst_11 = arith.constant 7.500000e-01 : f32
    %31 = vector.broadcast %cst_11 : f32 to vector<1x256xf32>
    %32 = arith.select %30, %31, %28 : vector<1x256xi1>, vector<1x256xf32>
    %c3_i32 = arith.constant 3 : i32
    %33 = vector.broadcast %c3_i32 : i32 to vector<1x256xi32>
    %34 = arith.cmpi eq, %6, %33 : vector<1x256xi32>
    %cst_12 = arith.constant 1.000000e+00 : f32
    %35 = vector.broadcast %cst_12 : f32 to vector<1x256xf32>
    %36 = arith.select %34, %35, %32 : vector<1x256xi1>, vector<1x256xf32>
    %37 = arith.mulf %22, %36 : vector<1x256xf32>
    %cst_13 = arith.constant 1.000000e+00 : f32
    %38 = vector.broadcast %cst_13 : f32 to vector<1x256xf32>
    %39 = arith.subf %38, %23 : vector<1x256xf32>
    %cst_14 = arith.constant 0.000000e+00 : f32
    %40 = vector.broadcast %cst_14 : f32 to vector<1x256xf32>
    %41 = arith.maximumf %39, %40 : vector<1x256xf32>
    %42 = arith.mulf %41, %41 : vector<1x256xf32>
    %43 = arith.mulf %42, %37 : vector<1x256xf32>
    %cst_15 = arith.constant 0.000000e+00 : f32
    %44 = vector.broadcast %cst_15 : f32 to vector<1x256xf32>
    %45 = arith.subf %44, %43 : vector<1x256xf32>
    %c0_i32_16 = arith.constant 0 : i32
    %46 = vector.broadcast %c0_i32_16 : i32 to vector<1x256xi32>
    %47 = arith.cmpi sge, %6, %46 : vector<1x256xi32>
    %cst_17 = arith.constant 0.000000e+00 : f32
    %48 = vector.broadcast %cst_17 : f32 to vector<1x256xf32>
    %49 = arith.select %47, %45, %48 : vector<1x256xi1>, vector<1x256xf32>
    %c0_18 = arith.constant 0 : index
    %c0_19 = arith.constant 0 : index
    %c0_20 = arith.constant 0 : index
    %c0_21 = arith.constant 0 : index
    %50 = vector.load %arg5[%c0_18, %c0_19, %c0_20, %c0_21] : memref<1x1x1x256xf32, #tpu.memory_space<vmem>>, vector<1x1x1x256xf32>
    %51 = vector.shape_cast %50 : vector<1x1x1x256xf32> to vector<1x256xf32>
    %52 = arith.addf %51, %49 : vector<1x256xf32>
    %c0_22 = arith.constant 0 : index
    %c0_23 = arith.constant 0 : index
    %c0_24 = arith.constant 0 : index
    %c0_25 = arith.constant 0 : index
    %53 = vector.load %arg5[%c0_22, %c0_23, %c0_24, %c0_25] : memref<1x1x1x256xf32, #tpu.memory_space<vmem>>, vector<1x1x1x256xf32>
    %54 = vector.shape_cast %53 : vector<1x1x1x256xf32> to vector<1x256xf32>
    %55 = vector.shape_cast %52 : vector<1x256xf32> to vector<1x1x1x256xf32>
    tpu.vector_store %arg5[%c0_22, %c0_23, %c0_24, %c0_25], %55 {strides = array<i32>} : memref<1x1x1x256xf32, #tpu.memory_space<vmem>>, vector<1x1x1x256xf32>,
    return
  }
  func.func @transform_0(%arg0: i32, %arg1: i32, %arg2: i32) -> (i32, i32, i32) {
    %c1_i32 = arith.constant 1 : i32
    %0 = arith.muli %arg1, %c1_i32 : i32
    %1 = arith.addi %0, %arg2 : i32
    %c0_i32 = arith.constant 0 : i32
    %c0_i32_0 = arith.constant 0 : i32
    return %arg0, %c0_i32, %1 : i32, i32, i32
  }
  func.func @transform_1(%arg0: i32, %arg1: i32, %arg2: i32) -> (i32, i32, i32) {
    %c1_i32 = arith.constant 1 : i32
    %0 = arith.muli %arg1, %c1_i32 : i32
    %1 = arith.addi %0, %arg2 : i32
    %c0_i32 = arith.constant 0 : i32
    %c0_i32_0 = arith.constant 0 : i32
    return %arg0, %c0_i32, %1 : i32, i32, i32
  }
  func.func @transform_2(%arg0: i32, %arg1: i32, %arg2: i32) -> (i32, i32, i32, i32) {
    %c0_i32 = arith.constant 0 : i32
    %c0_i32_0 = arith.constant 0 : i32
    %c0_i32_1 = arith.constant 0 : i32
    return %arg0, %arg1, %c0_i32, %c0_i32_0 : i32, i32, i32, i32
  }
}

</mosaic_0001>

<llo_original>
// kernel: tpu_custom_call.1
$region0: #{tpu_custom_call.1}
  #allocation0 [shape = 'u32[]', space=smem, size = 0x4, offset = 0x4, fixed_abs, tag = 'smem constant byte address 0x4 - core index']
  #allocation1 [shape = 'u32[72,128]{1,0:T(1,128)}', space=vmem, size = 0x9000, scoped, tag = 'internal scratch']
  %s0 = inlined_call_operand.hbm [shape: f32[2,4,256], index: 0, kind: input, shape index: {}]
  %s1 = inlined_call_operand.hbm [shape: s32[2,1,256], index: 1, kind: input, shape index: {}]
  %s2 = inlined_call_operand.hbm [shape: f32[2,1,1,256], index: 2, kind: output, shape index: {}]
  %s3 = sld [smem:[#allocation0]]
  $region53: #{tpu_custom_call.1} parent=0
    _
  %s5 = ssub.s32 1, %s3
  %s6 = scalar_select 0, %s5, %s3
  $region1: #{tpu_custom_call.1} parent=0
    #allocation2 [shape = 'u8[8192]{0}', space=vmem, size = 0x2000, scoped, tag = 'input window, operand 0']
    #allocation3 [shape = 's32[2]{0}', space=sflag, size = 0x8, scoped, tag = 'scoped memory for tpu_custom_call.1']
    #allocation4 [shape = 's32[2]{0}', space=sflag, size = 0x8, scoped, tag = 'scoped memory for tpu_custom_call.1']
    #allocation5 [shape = 'u8[2048]{0}', space=vmem, size = 0x800, scoped, tag = 'input window, operand 1']
    #allocation6 [shape = 's32[2]{0}', space=sflag, size = 0x8, scoped, tag = 'scoped memory for tpu_custom_call.1']
    #allocation7 [shape = 'u8[2048]{0}', space=vmem, size = 0x800, scoped, tag = 'output window, operand 0']
    %7 = vsyncpa [#allocation3], 0
    %s8 = scalar_lea.sflag [#allocation3], 1
    %9 = vsyncpa %s8, 0
    %10 = vsyncpa [#allocation6], 0
    %s11 = scalar_lea.sflag [#allocation6], 1
    %12 = vsyncpa %s11, 0
    %13 = vsyncpa [#allocation4], 0
    %s14 = scalar_lea.sflag [#allocation4], 1
    %15 = vsyncpa %s14, 0
    loop: start=0, step=1, limit=4
    $region2: #{tpu_custom_call.1} parent=1 // loop_pre_header
      _
    $region3: #{tpu_custom_call.1} parent=1 // loop_header
      %s17 = sphi 0, %s21
      %p18 = scmp.ge.s32.totalorder %s17, 4
      %s24 = sphi 0, %s43
      %s25 = sphi 0, %s39
      %s26 = sphi 0, %s35
      %s27 = sphi 0, %s24
      %s28 = sphi 0, %s25
      %s29 = sphi 0, %s26
      %s30 = sphi 0, %s27
      %s31 = sphi 0, %s28
      %s32 = sphi 0, %s29
      %s50 = sphi 0, %s52
      %s53 = sphi 0, %s50
      %s54 = sphi 0, %s53
      %s70 = sphi 0, %s54
      %s80 = sphi 0, %s82
      %s83 = sphi 0, %s80
      %s84 = sphi 0, %s83
      %s100 = sphi 0, %s84
      %s108 = sphi 0, %s110
      %s111 = sphi 0, %s108
      %s112 = sphi 0, %s111
      %s128 = sphi 0, %s112
    $region4: #{tpu_custom_call.1} parent=1 // loop_header_branch
      %20 = sbr.rel (%p18) target = $region8
    $region5: #{tpu_custom_call.1} parent=1 // loop_body
      %s22 = ssub.s32 %s17, 1
      %s23 = ssub.s32 %s17, 2
      %s33 = sadd.s32 1, %s26
      %p34 = scmp.ge.s32.totalorder %s33, 1
      %s35 = scalar_select %p34, 0, %s33
      %s36 = sadd.s32 1, %s25
      %s37 = scalar_select %p34, %s36, %s25
      %p38 = scmp.ge.s32.totalorder %s37, 1
      %s39 = scalar_select %p38, 0, %s37
      %s40 = sadd.s32 1, %s24
      %s41 = scalar_select %p38, %s40, %s24
      %p42 = scmp.ge.s32.totalorder %s41, 2
      %s43 = scalar_select %p42, 0, %s41
      %s44 = sadd.s32 %s25, %s26
      %s45 = sadd.s32 %s39, %s35
      %s46 = ssub.s32 %s24, %s43
      %s47 = ssub.s32 %s44, %s45
      %s48 = sor.u32 %s46, %s47
      %p49 = scmp.eq.s32.totalorder %s48, 0
      %s51 = sadd.s32 %s50, 1
      %s52 = scalar_select %p49, %s50, %s51
      %p55 = pneg %p49
      %p56 = scmp.eq.s32.totalorder %s17, 1
      %p57 = por %p55, %p56
      %p58 = scmp.ne.s32.totalorder %s50, %s53
      %p59 = scmp.eq.s32.totalorder %s17, 0
      %p60 = por %p58, %p59
      %p61 = scmp.ne.s32.totalorder %s50, %s53
      %p62 = scmp.eq.s32.totalorder %s22, 1
      %p63 = por %p61, %p62
      %p64 = scmp.ne.s32.totalorder %s53, %s54
      %p65 = scmp.eq.s32.totalorder %s22, 0
      %p66 = por %p64, %p65
      %p67 = scmp.ne.s32.totalorder %s53, %s54
      %p68 = scmp.eq.s32.totalorder %s23, 1
      %p69 = por %p67, %p68
      %p71 = scmp.ne.s32.totalorder %s54, %s70
      %p72 = scmp.eq.s32.totalorder %s23, 0
      %p73 = por %p71, %p72
      %s74 = sadd.s32 %s25, %s26
      %s75 = sadd.s32 %s39, %s35
      %s76 = ssub.s32 %s24, %s43
      %s77 = ssub.s32 %s74, %s75
      %s78 = sor.u32 %s76, %s77
      %p79 = scmp.eq.s32.totalorder %s78, 0
      %s81 = sadd.s32 %s80, 1
      %s82 = scalar_select %p79, %s80, %s81
      %p85 = pneg %p79
      %p86 = scmp.eq.s32.totalorder %s17, 1
      %p87 = por %p85, %p86
      %p88 = scmp.ne.s32.totalorder %s80, %s83
      %p89 = scmp.eq.s32.totalorder %s17, 0
      %p90 = por %p88, %p89
      %p91 = scmp.ne.s32.totalorder %s80, %s83
      %p92 = scmp.eq.s32.totalorder %s22, 1
      %p93 = por %p91, %p92
      %p94 = scmp.ne.s32.totalorder %s83, %s84
      %p95 = scmp.eq.s32.totalorder %s22, 0
      %p96 = por %p94, %p95
      %p97 = scmp.ne.s32.totalorder %s83, %s84
      %p98 = scmp.eq.s32.totalorder %s23, 1
      %p99 = por %p97, %p98
      %p101 = scmp.ne.s32.totalorder %s84, %s100
      %p102 = scmp.eq.s32.totalorder %s23, 0
      %p103 = por %p101, %p102
      %s104 = ssub.s32 %s24, %s43
      %s105 = ssub.s32 %s25, %s39
      %s106 = sor.u32 %s104, %s105
      %p107 = scmp.eq.s32.totalorder %s106, 0
      %s109 = sadd.s32 %s108, 1
      %s110 = scalar_select %p107, %s108, %s109
      %p113 = pneg %p107
      %p114 = scmp.eq.s32.totalorder %s17, 1
      %p115 = por %p113, %p114
      %p116 = scmp.ne.s32.totalorder %s108, %s111
      %p117 = scmp.eq.s32.totalorder %s17, 0
      %p118 = por %p116, %p117
      %p119 = scmp.ne.s32.totalorder %s108, %s111
      %p120 = scmp.eq.s32.totalorder %s22, 1
      %p121 = por %p119, %p120
      %p122 = scmp.ne.s32.totalorder %s111, %s112
      %p123 = scmp.eq.s32.totalorder %s22, 0
      %p124 = por %p122, %p123
      %p125 = scmp.ne.s32.totalorder %s111, %s112
      %p126 = scmp.eq.s32.totalorder %s23, 1
      %p127 = por %p125, %p126
      %p129 = scmp.ne.s32.totalorder %s112, %s128
      %p130 = scmp.eq.s32.totalorder %s23, 0
      %p131 = por %p129, %p130
      %p132 = scmp.le.s32.totalorder 1, %s17
      %p133 = scmp.lt.s32.totalorder %s17, 3
      %p134 = pnand %p132, %p133
      %p135 = pneg %p134
      // Predicated region
      $region9: #{tpu_custom_call.1} parent=5 // pred_check
        _
      $region10: #{tpu_custom_call.1} parent=5 // pred_check_branch
        %137 = sbr.rel (%p134) target = $region12
      $region11: #{tpu_custom_call.1} parent=5 // pred_region
        %s138 = ssub.s32 %s17, 1
      $region12: #{tpu_custom_call.1} parent=5 // pred_fallthru
        _
      %p139 = scmp.lt.s32.totalorder %s17, 2
      // Predicated region
      $region13: #{tpu_custom_call.1} parent=5 // pred_check
        %p140 = pneg %p139
      $region14: #{tpu_custom_call.1} parent=5 // pred_check_branch
        %142 = sbr.rel (%p140) target = $region16
      $region15: #{tpu_custom_call.1} parent=5 // pred_region
        // Predicated region
        $region17: #{tpu_custom_call.1} parent=15 // pred_check
          %p143 = pneg %p60
        $region18: #{tpu_custom_call.1} parent=15 // pred_check_branch
          %145 = sbr.rel (%p143) target = $region20
        $region19: #{tpu_custom_call.1} parent=15 // pred_region
          %s146 = sand.u32 %s50, 1
          %s147 = scalar_lea.sflag [#allocation3], %s146
          %s148 = sand.u32 %s50, 1
          %s149 = smul.addr %s148, 8
          %s150 = scalar_lea.vmem [#allocation2], %s149
          %s151 = sadd.s32 %s25, %s26
          %s152 = smul.u32 2, %s151
          %154 = vsyncadd %s147, 0
          %s155 = smul.addr %s24, 2
          %s156 = sadd.s32 %s152, %s155
          %s157 = smul.addr %s156, 4
          %s158 = scalar_lea.hbm %s0, %s157
          %s160 = sshll.u32 %s158, 4
          %s161 = int_to_ptr.hbm [resolvable:$true] %s160
          %s162 = sshll.u32 %s150, 4
          %s163 = int_to_ptr.vmem [resolvable:$true] %s162
          %165 = dma.hbm_to_vmem [thread:$0]  %s161, 128, %s163, %s147
        $region20: #{tpu_custom_call.1} parent=15 // pred_fallthru
          _
        // Predicated region
        $region21: #{tpu_custom_call.1} parent=15 // pred_check
          %p166 = pneg %p90
        $region22: #{tpu_custom_call.1} parent=15 // pred_check_branch
          %168 = sbr.rel (%p166) target = $region24
        $region23: #{tpu_custom_call.1} parent=15 // pred_region
          %s169 = sand.u32 %s80, 1
          %s170 = scalar_lea.sflag [#allocation6], %s169
          %s171 = sand.u32 %s80, 1
          %s172 = smul.addr %s171, 2
          %s173 = scalar_lea.vmem [#allocation5], %s172
          %s174 = sadd.s32 %s25, %s26
          %s175 = smul.u32 2, %s174
          %177 = vsyncadd %s170, 0
          %s178 = smul.addr %s24, 2
          %s179 = sadd.s32 %s175, %s178
          %s180 = scalar_lea.hbm %s1, %s179
          %s182 = sshll.u32 %s180, 4
          %s183 = int_to_ptr.hbm [resolvable:$true] %s182
          %s184 = sshll.u32 %s173, 4
          %s185 = int_to_ptr.vmem [resolvable:$true] %s184
          %187 = dma.hbm_to_vmem [thread:$0]  %s183, 32, %s185, %s170
        $region24: #{tpu_custom_call.1} parent=15 // pred_fallthru
          _
      $region16: #{tpu_custom_call.1} parent=5 // pred_fallthru
        _
      %p188 = scmp.le.s32.totalorder 1, %s17
      %p189 = scmp.lt.s32.totalorder %s17, 3
      %p190 = pnand %p188, %p189
      %p191 = pneg %p190
      // Predicated region
      $region25: #{tpu_custom_call.1} parent=5 // pred_check
        _
      $region26: #{tpu_custom_call.1} parent=5 // pred_check_branch
        %193 = sbr.rel (%p190) target = $region28
      $region27: #{tpu_custom_call.1} parent=5 // pred_region
        %s194 = ssub.s32 %s17, 1
        %s195 = sand.u32 %s53, 1
        %s196 = scalar_lea.sflag [#allocation3], %s195
        %s197 = sand.u32 %s53, 1
        %s198 = smul.addr %s197, 8
        %s199 = scalar_lea.vmem [#allocation2], %s198
        // Predicated region
        $region29: #{tpu_custom_call.1} parent=27 // pred_check
          %p200 = pneg %p66
        $region30: #{tpu_custom_call.1} parent=27 // pred_check_branch
          %202 = sbr.rel (%p200) target = $region32
        $region31: #{tpu_custom_call.1} parent=27 // pred_region
          %204 = dma.done %s196, 128
        $region32: #{tpu_custom_call.1} parent=27 // pred_fallthru
          _
        %s205 = sand.u32 %s83, 1
        %s206 = scalar_lea.sflag [#allocation6], %s205
        %s207 = sand.u32 %s83, 1
        %s208 = smul.addr %s207, 2
        %s209 = scalar_lea.vmem [#allocation5], %s208
        // Predicated region
        $region33: #{tpu_custom_call.1} parent=27 // pred_check
          %p210 = pneg %p96
        $region34: #{tpu_custom_call.1} parent=27 // pred_check_branch
          %212 = sbr.rel (%p210) target = $region36
        $region35: #{tpu_custom_call.1} parent=27 // pred_region
          %214 = dma.done %s206, 32
        $region36: #{tpu_custom_call.1} parent=27 // pred_fallthru
          _
        %s215 = sand.u32 %s53, 1
        %s216 = scalar_lea.sflag [#allocation3], %s215
        %s217 = sand.u32 %s53, 1
        %s218 = smul.addr %s217, 8
        %s219 = scalar_lea.vmem [#allocation2], %s218
        %p220 = pneg %p66
        %p221 = pneg %p63
        %s222 = sand.u32 %s83, 1
        %s223 = scalar_lea.sflag [#allocation6], %s222
        %s224 = sand.u32 %s83, 1
        %s225 = smul.addr %s224, 2
        %s226 = scalar_lea.vmem [#allocation5], %s225
        %p227 = pneg %p96
        %p228 = pneg %p93
        %p229 = pneg %p124
        %p230 = pneg %p121
        %s231 = sand.u32 %s111, 1
        %s232 = scalar_lea.sflag [#allocation4], %s231
        %s233 = sand.u32 %s111, 1
        %s234 = smul.addr %s233, 2
        %s235 = scalar_lea.vmem [#allocation7], %s234
        %s236 = sadd.s32 %s28, %s29
        %s237 = smul.u32 2, %s236
        %s238 = sadd.s32 %s28, %s29
        %s239 = smul.u32 2, %s238
        %p240 = scmp.eq.s32.totalorder %s29, 0
        // Predicated region
        $region37: #{tpu_custom_call.1} parent=27 // pred_check
          %p241 = pneg %p240
        $region38: #{tpu_custom_call.1} parent=27 // pred_check_branch
          %243 = sbr.rel (%p241) target = $region40
        $region39: #{tpu_custom_call.1} parent=27 // pred_region
          %v244 = vlaneseq
          %vm245 = vcmp.ge.s32.totalorder %v244, 0
          %vm246 = vcmp.lt.s32.totalorder %v244, 256
          %vm247 = vmand %vm245, %vm246
          %248 = vst.msk [vmem:[%s235] sm:$0x3] %vm247, 0.0
        $region40: #{tpu_custom_call.1} parent=27 // pred_fallthru
          _
        %v249 = vld [vmem:[%s199] sm:$0xff]
        %v250 = vld [vmem:[%s209] sm:$0x3]
        %252 = vst [vmem:[#allocation1] ss:$2 sm:$0xff] %v249
        %v253 = vld.sshfl [vmem:[#allocation1] sm:$0xff pattern:$0x75316420]
        %v254 = vld.sshfl [vmem:[#allocation1 + $0x8] sm:$0xff pattern:$0x75316420]
        %vm257 = vcmask 1043456
        %v258 = vsel %vm257, %v253, -inf
        %v259 = vrot.slane %v258, 4
        %v260 = vmax.f32 %v258, %v259
        %v261 = vrot.slane %v260, 2
        %v262 = vmax.f32 %v260, %v261
        %v263 = vrot.slane %v262, 1
        %v264 = vmax.f32 %v262, %v263
        %v265 = vsel %vm257, %v254, -inf
        %v266 = vrot.slane %v265, 4
        %v267 = vmax.f32 %v265, %v266
        %v268 = vrot.slane %v267, 2
        %v269 = vmax.f32 %v267, %v268
        %v270 = vrot.slane %v269, 1
        %v271 = vmax.f32 %v269, %v270
        %v274 = vrot.slane %v271, 4
        %v275 = vsel %vm257, %v264, %v274
        %v277 = vsub.f32 %v249, %v275
        %v278 = vmul.f32 %v277, 1.442695
        %v279 = vpow.pop %v278
        %281 = vst [vmem:[#allocation1] ss:$2 sm:$0xff] %v279
        %v282 = vld.sshfl [vmem:[#allocation1] sm:$0xff pattern:$0x75316420]
        %v283 = vld.sshfl [vmem:[#allocation1 + $0x8] sm:$0xff pattern:$0x75316420]
        %v286 = vsel %vm257, %v282, 0.0
        %v287 = vrot.slane %v286, 4
        %v288 = vadd.f32 %v286, %v287
        %v289 = vrot.slane %v288, 2
        %v290 = vadd.f32 %v288, %v289
        %v291 = vrot.slane %v290, 1
        %v292 = vadd.f32 %v290, %v291
        %v293 = vsel %vm257, %v283, 0.0
        %v294 = vrot.slane %v293, 4
        %v295 = vadd.f32 %v293, %v294
        %v296 = vrot.slane %v295, 2
        %v297 = vadd.f32 %v295, %v296
        %v298 = vrot.slane %v297, 1
        %v299 = vadd.f32 %v297, %v298
        %v300 = vlaneseq
        %v301 = vshrl.u32 %v300, 7
        %v302 = vperm.slane %v250, 0
        %v303 = vperm.slane %v250, 1
        %vm304 = vcmp.eq.s32.totalorder %v301, %v302
        %vm305 = vcmp.eq.s32.totalorder %v301, %v303
        %307 = vst [vmem:[#allocation1] ss:$2 sm:$0xff] %v277
        %v308 = vld.sshfl [vmem:[#allocation1] sm:$0xff pattern:$0x75316420]
        %v309 = vld.sshfl [vmem:[#allocation1 + $0x8] sm:$0xff pattern:$0x75316420]
        %v312 = vsel %vm304, %v308, 0.0
        %v313 = vsel %vm305, %v309, 0.0
        %v314 = vsel %vm257, %v312, 0.0
        %v315 = vrot.slane %v314, 4
        %v316 = vadd.f32 %v314, %v315
        %v317 = vrot.slane %v316, 2
        %v318 = vadd.f32 %v316, %v317
        %v319 = vrot.slane %v318, 1
        %v320 = vadd.f32 %v318, %v319
        %v321 = vsel %vm257, %v313, 0.0
        %v322 = vrot.slane %v321, 4
        %v323 = vadd.f32 %v321, %v322
        %v324 = vrot.slane %v323, 2
        %v325 = vadd.f32 %v323, %v324
        %v326 = vrot.slane %v325, 1
        %v327 = vadd.f32 %v325, %v326
        %v328 = vlog2.pop %v292
        %v329 = vmul.f32 %v328, 0.6931472
        %v330 = vlog2.pop %v299
        %v331 = vmul.f32 %v330, 0.6931472
        %v332 = vsub.f32 %v320, %v329
        %v333 = vsub.f32 %v327, %v331
        %v334 = vmul.f32 %v332, 1.442695
        %v335 = vpow.pop %v334
        %v336 = vmul.f32 %v333, 1.442695
        %v337 = vpow.pop %v336
        %vm338 = vcmp.eq.s32.totalorder %v250, 1
        %v339 = vsel %vm338, 0.5, 0.25
        %vm340 = vcmp.eq.s32.totalorder %v250, 2
        %v341 = vsel %vm340, 0.75, %v339
        %vm342 = vcmp.eq.s32.totalorder %v250, 3
        %v343 = vsel %vm342, 1.0, %v341
        %v345 = vperm.slane %v343, 0
        %v346 = vperm.slane %v343, 1
        %v349 = vmul.f32 %v332, %v345
        %v350 = vmul.f32 %v333, %v346
        %v351 = vsub.f32 1.0, %v335
        %v352 = vsub.f32 1.0, %v337
        %v353 = vmax.f32 %v351, 0.0
        %v354 = vmax.f32 %v352, 0.0
        %v355 = vmul.f32 %v353, %v353
        %v356 = vmul.f32 %v354, %v354
        %v357 = vmul.f32 %v355, %v349
        %v358 = vmul.f32 %v356, %v350
        %v359 = vsub.f32 0.0, %v357
        %v360 = vsub.f32 0.0, %v358
        %vm361 = vcmp.ge.s32.totalorder %v250, 0
        %v364 = vrot.slane %v360, 7
        %vm365 = vcmask 1040384
        %v366 = vsel %vm365, %v359, %v364
        %v368 = vsel %vm361, %v366, 0.0
        %v369 = vld [vmem:[%s235] sm:$0x3]
        %v370 = vadd.f32 %v369, %v368
        %v371 = vlaneseq
        %vm372 = vcmp.ge.s32.totalorder %v371, 0
        %vm373 = vcmp.lt.s32.totalorder %v371, 256
        %vm374 = vmand %vm372, %vm373
        %375 = vst.msk [vmem:[%s235] sm:$0x3] %vm374, %v370
        %s376 = sand.u32 %s111, 1
        %s377 = scalar_lea.sflag [#allocation4], %s376
        %s378 = sand.u32 %s111, 1
        %s379 = smul.addr %s378, 2
        %s380 = scalar_lea.vmem [#allocation7], %s379
        // Predicated region
        $region41: #{tpu_custom_call.1} parent=27 // pred_check
          %p381 = pneg %p121
        $region42: #{tpu_custom_call.1} parent=27 // pred_check_branch
          %383 = sbr.rel (%p381) target = $region44
        $region43: #{tpu_custom_call.1} parent=27 // pred_region
          %385 = vsyncadd %s377, 0
          %s386 = smul.addr %s28, 2
          %s387 = smul.addr %s27, 2
          %s388 = sadd.s32 %s386, %s387
          %s389 = scalar_lea.hbm %s2, %s388
          %s391 = sshll.u32 %s380, 4
          %s392 = int_to_ptr.vmem [resolvable:$true] %s391
          %s393 = sshll.u32 %s389, 4
          %s394 = int_to_ptr.hbm [resolvable:$true] %s393
          %396 = dma.vmem_to_hbm [thread:$0]  %s392, 32, %s394, %s377
        $region44: #{tpu_custom_call.1} parent=27 // pred_fallthru
          _
      $region28: #{tpu_custom_call.1} parent=5 // pred_fallthru
        _
      %p397 = scmp.le.s32.totalorder 2, %s17
      // Predicated region
      $region45: #{tpu_custom_call.1} parent=5 // pred_check
        %p398 = pneg %p397
      $region46: #{tpu_custom_call.1} parent=5 // pred_check_branch
        %400 = sbr.rel (%p398) target = $region48
      $region47: #{tpu_custom_call.1} parent=5 // pred_region
        %s401 = ssub.s32 %s17, 2
        // Predicated region
        $region49: #{tpu_custom_call.1} parent=47 // pred_check
          %p402 = pneg %p127
        $region50: #{tpu_custom_call.1} parent=47 // pred_check_branch
          %404 = sbr.rel (%p402) target = $region52
        $region51: #{tpu_custom_call.1} parent=47 // pred_region
          %s405 = sand.u32 %s112, 1
          %s406 = scalar_lea.sflag [#allocation4], %s405
          %s407 = sand.u32 %s112, 1
          %s408 = smul.addr %s407, 2
          %s409 = scalar_lea.vmem [#allocation7], %s408
          %411 = dma.done %s406, 32
        $region52: #{tpu_custom_call.1} parent=47 // pred_fallthru
          _
      $region48: #{tpu_custom_call.1} parent=5 // pred_fallthru
        _
    $region6: #{tpu_custom_call.1} parent=1 // loop_footer
      %s21 = sadd.s32 1, %s17
    $region7: #{tpu_custom_call.1} parent=1 // loop_footer_branch
      %16 = sbr.rel target = $region3
    $region8: #{tpu_custom_call.1} parent=1 // loop_exit
      _
    %412 = vsyncpa [#allocation3], 1
    %s413 = scalar_lea.sflag [#allocation3], 1
    %414 = vsyncpa %s413, 1
    %415 = vsyncpa [#allocation6], 1
    %s416 = scalar_lea.sflag [#allocation6], 1
    %417 = vsyncpa %s416, 1
    %418 = vsyncpa [#allocation4], 1
    %s419 = scalar_lea.sflag [#allocation4], 1
    %420 = vsyncpa %s419, 1

</llo_original>
